<compile_context>
chip_gen: v5e
topology: v5e:2x2
jax: 0.10.0
libtpu: 0.0.40
codegen_flags: <defaults>
</compile_context>

<pallas_src>
import functools

import jax
import jax.numpy as jnp
import numpy as np
from jax.experimental import pallas as pl
from jax.experimental.pallas import tpu as pltpu

_NORM_EPS = 1e-12              # NormSE3 clamp eps
_LN_EPS = 1e-5                 # nn.LayerNorm default eps
_SQRT_2_OVER_PI = 0.7978845608028654


def _round_up(x, k):
    return ((x + k - 1) // k) * k


def _cdiv(a, b):
    return -(-a // b)


def _gelu_tanh(x):
    # tanh approximation of GELU (nn.GELU() default is erf-based; diff < 1e-3).
    return 0.5 * x * (1.0 + jnp.tanh(_SQRT_2_OVER_PI * (x + 0.044715 * x * x * x)))


def _layernorm(x, gamma, beta, eps=_LN_EPS):
    """Two-pass (mean-centered) LayerNorm over the last axis.

    The inputs here are strictly-positive norms, so the single-pass
    E[x^2]-E[x]^2 form can cancel badly in f32 when mean >> std.
    """
    mu = jnp.mean(x, axis=-1, keepdims=True)
    xc = x - mu
    var = jnp.mean(xc * xc, axis=-1, keepdims=True)
    return xc * jax.lax.rsqrt(var + eps) * gamma + beta


def _ff_block_kernel(x_ref, ln0g_ref, ln0b_ref, w_in_ref,
                     ln1g_ref, ln1b_ref, w_out_ref, out_ref, *, m):
    # x_ref / out_ref: (m, TE, C).  W_in: (C, H), W_out: (H, C).  LN params: (1, C)/(1, H).
    te = x_ref.shape[1]
    C = x_ref.shape[2]
    H = w_in_ref.shape[1]

    x = x_ref[...]                                             # (m, TE, C) f32

    # ---- prenorm: NormSE3 on the input fiber --------------------------------
    sq = jnp.sum(x * x, axis=0)                                # (TE, C) = |x|^2 over m
    inv0 = jax.lax.rsqrt(jnp.maximum(sq, _NORM_EPS * _NORM_EPS))   # 1 / max(|x|, eps)
    norm0 = sq * inv0                                          # == max(|x|, eps)
    g0 = _gelu_tanh(_layernorm(norm0, ln0g_ref[...], ln0b_ref[...]))
    scale0 = g0 * inv0                                         # transformed / norm

    # ---- project_in: ONE fused (m*TE, C) @ (C, H) MXU matmul ----------------
    w_in = w_in_ref[...]
    y = (x * scale0[None]).reshape(m * te, C)                  # scale shared across m
    h = jnp.dot(y.astype(w_in.dtype), w_in,
                preferred_element_type=jnp.float32)            # (m*TE, H) f32 acc

    # ---- NormSE3 on the hidden fiber ----------------------------------------
    h3 = h.reshape(m, te, H)
    sqh = jnp.sum(h3 * h3, axis=0)                             # (TE, H)
    inv1 = jax.lax.rsqrt(jnp.maximum(sqh, _NORM_EPS * _NORM_EPS))
    norm1 = sqh * inv1
    g1 = _gelu_tanh(_layernorm(norm1, ln1g_ref[...], ln1b_ref[...]))
    scale1 = g1 * inv1                                         # (TE, H)

    # ---- project_out: ONE fused (m*TE, H) @ (H, C) matmul + residual --------
    w_out = w_out_ref[...]
    z = (h3 * scale1[None]).reshape(m * te, H)
    o = jnp.dot(z.astype(w_out.dtype), w_out,
                preferred_element_type=jnp.float32)            # (m*TE, C)

    res = x_ref[...]                                           # cheap VMEM reload for residual
    out_ref[...] = (o.reshape(m, te, C) + res).astype(out_ref.dtype)


def _choose_tile(N, tile_e):
    """Node-tile rows: multiple of 8, <= tile_e, >= 2 grid steps when N allows,
    dividing N when possible (skips the host-side pad copy), with a mild
    preference for an even step count (v7x runs the parallel axis on 2 TCs)."""
    cap = min(int(tile_e), max(8, _round_up(_cdiv(N, 2), 8)))
    cap = max(8, (cap // 8) * 8)
    divisors = [te for te in range(8, cap + 1, 8) if N % te == 0]
    if not divisors:
        return cap                                   # ragged N: fall back to padding
    best = max(divisors)
    even = [te for te in divisors if (N // te) % 2 == 0 and 4 * te >= 3 * best]
    return max(even) if even else best


def _ff_block_degree(t, p, *, tile_e, use_bf16):
    b, n, C, m = t.shape
    H = p['w_in'].shape[1]
    N = b * n

    # Layout plumbing: (b, n, C, m) -> (m, N, C) so C / H are the lane dims.
    # TODO(synk): in a full SE3 stack keep activations in (m, N, C) between blocks
    # so this tiny-minor-dim transpose is paid only once.
    x = t.astype(jnp.float32).reshape(N, C, m).transpose(2, 0, 1)

    te = _choose_tile(N, tile_e)
    Np = _round_up(N, te)
    if Np != N:
        # Rare fallback (N not a multiple of 8). Zero rows are harmless: they yield
        # finite scales multiplied by exact zeros, and are dropped after the call.
        x = jnp.pad(x, ((0, 0), (0, Np - N), (0, 0)))
    grid = (Np // te,)

    wdt = jnp.bfloat16 if use_bf16 else jnp.float32
    w_in = p['w_in'].astype(wdt)
    w_out = p['w_out'].astype(wdt)
    ln0g = p['ln0_g'].reshape(1, C).astype(jnp.float32)
    ln0b = p['ln0_b'].reshape(1, C).astype(jnp.float32)
    ln1g = p['ln1_g'].reshape(1, H).astype(jnp.float32)
    ln1b = p['ln1_b'].reshape(1, H).astype(jnp.float32)

    kernel = functools.partial(_ff_block_kernel, m=m)

    flops = 4 * Np * m * C * H + 20 * Np * m * (C + H)
    transcendentals = 3 * Np * (C + H)
    bytes_accessed = (8 * m * Np * C                       # x in + out (f32)
                      + 2 * C * H * (2 if use_bf16 else 4) * 2
                      + 4 * 2 * (C + H))

    # NOTE: W_in / W_out / LN params have constant index_maps; pl.Buffered(1)
    # (single-buffering) would shave a few MB of VMEM at production C — negligible
    # at C=32, so default double-buffering is kept for robustness.
    out = pl.pallas_call(
        kernel,
        out_shape=jax.ShapeDtypeStruct((m, Np, C), jnp.float32),
        grid_spec=pltpu.PrefetchScalarGridSpec(
            num_scalar_prefetch=0,
            grid=grid,
            in_specs=[
                pl.BlockSpec((m, te, C), lambda e: (0, e, 0)),   # x
                pl.BlockSpec((1, C), lambda e: (0, 0)),          # LN0 gamma
                pl.BlockSpec((1, C), lambda e: (0, 0)),          # LN0 beta
                pl.BlockSpec((C, H), lambda e: (0, 0)),          # W_in
                pl.BlockSpec((1, H), lambda e: (0, 0)),          # LN1 gamma
                pl.BlockSpec((1, H), lambda e: (0, 0)),          # LN1 beta
                pl.BlockSpec((H, C), lambda e: (0, 0)),          # W_out
            ],
            out_specs=pl.BlockSpec((m, te, C), lambda e: (0, e, 0)),
        ),
        compiler_params=pltpu.CompilerParams(
            dimension_semantics=("parallel",),
            # 48 MiB: fits v7x's 64 MiB physical VMEM with headroom, and lifts the
            # small default scoped limits on v5e/v6e.
            vmem_limit_bytes=48 * 1024 * 1024,
        ),
        cost_estimate=pl.CostEstimate(
            flops=int(flops),
            transcendentals=int(transcendentals),
            bytes_accessed=int(bytes_accessed),
        ),
    )(x, ln0g, ln0b, w_in, ln1g, ln1b, w_out)

    out = out[:, :N, :]                                    # drop node padding (if any)
    return out.transpose(1, 2, 0).reshape(b, n, C, m)


def feedforward_block_se3_forward(features, params, *, tile_e=512, use_bf16=True):
    """features: dict degree(str) -> (b, n, dim, 2*degree+1) array."""
    return {deg: _ff_block_degree(t, params[deg], tile_e=tile_e, use_bf16=use_bf16)
            for deg, t in features.items()}


# ----------------------------- pure-JAX reference -----------------------------
def _norm_se3_ref(t, gamma, beta, *, approx_gelu):
    norm = jnp.maximum(jnp.sqrt(jnp.sum(t * t, axis=-1, keepdims=True)), _NORM_EPS)
    phase = t / norm
    x = norm[..., 0]
    mu = jnp.mean(x, axis=-1, keepdims=True)
    var = jnp.mean(jnp.square(x - mu), axis=-1, keepdims=True)
    ln = (x - mu) * jax.lax.rsqrt(var + _LN_EPS) * gamma + beta
    g = _gelu_tanh(ln) if approx_gelu else jax.nn.gelu(ln, approximate=False)
    return g[..., None] * phase


def reference_forward(features, params, *, approx_gelu=False):
    """Mirrors FeedForwardBlockSE3: prenorm -> project_in -> NormSE3 -> project_out -> residual."""
    hp = jax.lax.Precision.HIGHEST
    out = {}
    for degree, t in features.items():
        p = params[degree]
        x = _norm_se3_ref(t, p['ln0_g'], p['ln0_b'], approx_gelu=approx_gelu)
        h = jnp.einsum('bndm,de->bnem', x, p['w_in'], precision=hp)
        h = _norm_se3_ref(h, p['ln1_g'], p['ln1_b'], approx_gelu=approx_gelu)
        o = jnp.einsum('bndm,de->bnem', h, p['w_out'], precision=hp)
        out[degree] = o + t
    return out


if __name__ == "__main__":
    key = jax.random.PRNGKey(0)
    b, n = 2, 8                              # batch, nodes
    fiber = ((0, 32), (1, 32), (2, 32))      # Fiber.create(num_degrees=3, dim=32)
    mult = 4                                 # FeedForwardSE3 hidden multiplier

    features, params = {}, {}
    for degree, dim in fiber:
        m = 2 * degree + 1
        H = dim * mult
        key, k1, k2, k3, k4, k5, k6, k7 = jax.random.split(key, 8)
        features[str(degree)] = jax.random.normal(k1, (b, n, dim, m), jnp.float32)
        params[str(degree)] = dict(
            ln0_g=1.0 + 0.1 * jax.random.normal(k2, (dim,), jnp.float32),
            ln0_b=0.1 * jax.random.normal(k3, (dim,), jnp.float32),
            w_in=jax.random.normal(k4, (dim, H), jnp.float32) / np.sqrt(dim),
            ln1_g=1.0 + 0.1 * jax.random.normal(k5, (H,), jnp.float32),
            ln1_b=0.1 * jax.random.normal(k6, (H,), jnp.float32),
            w_out=jax.random.normal(k7, (H, dim), jnp.float32) / np.sqrt(H),
        )

    # 1) f32 matmul path vs. a matching (tanh-GELU) f32 reference: structural check.
    out_f32 = jax.block_until_ready(
        feedforward_block_se3_forward(features, params, use_bf16=False))
    ref_tanh = jax.block_until_ready(reference_forward(features, params, approx_gelu=True))
    for deg in features:
        a, r = np.asarray(out_f32[deg]), np.asarray(ref_tanh[deg])
        assert a.shape == r.shape, (deg, a.shape, r.shape)
        rel = np.linalg.norm(a - r) / max(np.linalg.norm(r), 1e-12)
        assert rel < 2e-3, f"f32 path mismatch for degree {deg}: rel err {rel}"

    # 2) default bf16 MXU path vs. the faithful (erf-GELU) reference.
    out_bf16 = jax.block_until_ready(
        feedforward_block_se3_forward(features, params, use_bf16=True))
    ref = jax.block_until_ready(reference_forward(features, params, approx_gelu=False))
    for deg in features:
        a, r = np.asarray(out_bf16[deg]), np.asarray(ref[deg])
        assert a.shape == r.shape, (deg, a.shape, r.shape)
        rel = np.linalg.norm(a - r) / max(np.linalg.norm(r), 1e-12)
        assert rel < 3e-2, f"bf16 path mismatch for degree {deg}: rel err {rel}"

    print("KERNEL_OK")
</pallas_src>

<mosaic_0001>
module attributes {stable_mosaic.version = 11 : i64} {
  func.func @_ff_block_kernel(%arg0: i32, %arg1: memref<1x8x32xf32, #tpu.memory_space<vmem>>, %arg2: memref<1x32xf32, #tpu.memory_space<vmem>>, %arg3: memref<1x32xf32, #tpu.memory_space<vmem>>, %arg4: memref<32x128xf32, #tpu.memory_space<vmem>>, %arg5: memref<1x128xf32, #tpu.memory_space<vmem>>, %arg6: memref<1x128xf32, #tpu.memory_space<vmem>>, %arg7: memref<128x32xf32, #tpu.memory_space<vmem>>, %arg8: memref<1x8x32xf32, #tpu.memory_space<vmem>>) attributes {dimension_semantics = [#tpu.dimension_semantics<parallel>], iteration_bounds = array<i64: 2>, scalar_prefetch = 0 : i64, scratch_operands = 0 : i64, tpu.core_type = #tpu.core_type<tc>, window_params = [{transform_indices = @transform_0, window_bounds = array<i64: 1, 8, 32>}, {pipeline_mode = #tpu.pipeline_mode<synchronous>, transform_indices = @transform_1, window_bounds = array<i64: 1, 32>}, {pipeline_mode = #tpu.pipeline_mode<synchronous>, transform_indices = @transform_2, window_bounds = array<i64: 1, 32>}, {pipeline_mode = #tpu.pipeline_mode<synchronous>, transform_indices = @transform_3, window_bounds = array<i64: 32, 128>}, {pipeline_mode = #tpu.pipeline_mode<synchronous>, transform_indices = @transform_4, window_bounds = array<i64: 1, 128>}, {pipeline_mode = #tpu.pipeline_mode<synchronous>, transform_indices = @transform_5, window_bounds = array<i64: 1, 128>}, {pipeline_mode = #tpu.pipeline_mode<synchronous>, transform_indices = @transform_6, window_bounds = array<i64: 128, 32>}, {transform_indices = @transform_7, window_bounds = array<i64: 1, 8, 32>}]} {
    %c0 = arith.constant 0 : index
    %c0_0 = arith.constant 0 : index
    %c0_1 = arith.constant 0 : index
    %0 = vector.load %arg1[%c0, %c0_0, %c0_1] : memref<1x8x32xf32, #tpu.memory_space<vmem>>, vector<1x8x32xf32>
    %1 = arith.mulf %0, %0 : vector<1x8x32xf32>
    %cst = arith.constant dense<0.000000e+00> : vector<8x32xf32>
    %2 = vector.multi_reduction <add>, %1, %cst [0] : vector<1x8x32xf32> to vector<8x32xf32>
    %cst_2 = arith.constant 1.000000e-24 : f32
    %3 = vector.broadcast %cst_2 : f32 to vector<8x32xf32>
    %4 = arith.maximumf %2, %3 : vector<8x32xf32>
    %5 = math.rsqrt %4 : vector<8x32xf32>
    %6 = arith.mulf %2, %5 : vector<8x32xf32>
    %c0_3 = arith.constant 0 : index
    %c0_4 = arith.constant 0 : index
    %7 = vector.load %arg2[%c0_3, %c0_4] : memref<1x32xf32, #tpu.memory_space<vmem>>, vector<1x32xf32>
    %c0_5 = arith.constant 0 : index
    %c0_6 = arith.constant 0 : index
    %8 = vector.load %arg3[%c0_5, %c0_6] : memref<1x32xf32, #tpu.memory_space<vmem>>, vector<1x32xf32>
    %cst_7 = arith.constant dense<0.000000e+00> : vector<8xf32>
    %9 = vector.multi_reduction <add>, %6, %cst_7 [1] : vector<8x32xf32> to vector<8xf32>
    %10 = vector.shape_cast %9 : vector<8xf32> to vector<8x1xf32>
    %cst_8 = arith.constant 3.200000e+01 : f32
    %11 = vector.broadcast %cst_8 : f32 to vector<8x1xf32>
    %12 = arith.divf %10, %11 : vector<8x1xf32>
    %13 = vector.broadcast %12 : vector<8x1xf32> to vector<8x32xf32>
    %14 = arith.subf %6, %13 : vector<8x32xf32>
    %15 = arith.mulf %14, %14 : vector<8x32xf32>
    %cst_9 = arith.constant dense<0.000000e+00> : vector<8xf32>
    %16 = vector.multi_reduction <add>, %15, %cst_9 [1] : vector<8x32xf32> to vector<8xf32>
    %17 = vector.shape_cast %16 : vector<8xf32> to vector<8x1xf32>
    %cst_10 = arith.constant 3.200000e+01 : f32
    %18 = vector.broadcast %cst_10 : f32 to vector<8x1xf32>
    %19 = arith.divf %17, %18 : vector<8x1xf32>
    %cst_11 = arith.constant 9.99999974E-6 : f32
    %20 = vector.broadcast %cst_11 : f32 to vector<8x1xf32>
    %21 = arith.addf %19, %20 : vector<8x1xf32>
    %22 = math.rsqrt %21 : vector<8x1xf32>
    %23 = vector.broadcast %22 : vector<8x1xf32> to vector<8x32xf32>
    %24 = arith.mulf %14, %23 : vector<8x32xf32>
    %25 = vector.broadcast %7 : vector<1x32xf32> to vector<8x32xf32>
    %26 = arith.mulf %24, %25 : vector<8x32xf32>
    %27 = vector.broadcast %8 : vector<1x32xf32> to vector<8x32xf32>
    %28 = arith.addf %26, %27 : vector<8x32xf32>
    %cst_12 = arith.constant 5.000000e-01 : f32
    %29 = vector.broadcast %cst_12 : f32 to vector<8x32xf32>
    %30 = arith.mulf %29, %28 : vector<8x32xf32>
    %cst_13 = arith.constant 4.471500e-02 : f32
    %31 = vector.broadcast %cst_13 : f32 to vector<8x32xf32>
    %32 = arith.mulf %31, %28 : vector<8x32xf32>
    %33 = arith.mulf %32, %28 : vector<8x32xf32>
    %34 = arith.mulf %33, %28 : vector<8x32xf32>
    %35 = arith.addf %28, %34 : vector<8x32xf32>
    %cst_14 = arith.constant 0.797884583 : f32
    %36 = vector.broadcast %cst_14 : f32 to vector<8x32xf32>
    %37 = arith.mulf %36, %35 : vector<8x32xf32>
    %38 = math.tanh %37 : vector<8x32xf32>
    %cst_15 = arith.constant 1.000000e+00 : f32
    %39 = vector.broadcast %cst_15 : f32 to vector<8x32xf32>
    %40 = arith.addf %39, %38 : vector<8x32xf32>
    %41 = arith.mulf %30, %40 : vector<8x32xf32>
    %42 = arith.mulf %41, %5 : vector<8x32xf32>
    %c0_16 = arith.constant 0 : index
    %c0_17 = arith.constant 0 : index
    %43 = vector.load %arg4[%c0_16, %c0_17] : memref<32x128xf32, #tpu.memory_space<vmem>>, vector<32x128xf32>
    %44 = vector.shape_cast %42 : vector<8x32xf32> to vector<1x8x32xf32>
    %45 = arith.mulf %0, %44 : vector<1x8x32xf32>
    %46 = vector.shape_cast %45 : vector<1x8x32xf32> to vector<8x32xf32>
    %cst_18 = arith.constant dense<0.000000e+00> : vector<8x128xf32>
    %47 = tpu.matmul %46, %43, %cst_18 {dimension_numbers = #tpu.dot_dimension_numbers<[1], [0], [0], [1], [0, 0, 1, 1], [], []>} : vector<8x32xf32>, vector<32x128xf32>, vector<8x128xf32> -> vector<8x128xf32>
    %48 = vector.shape_cast %47 : vector<8x128xf32> to vector<1x8x128xf32>
    %49 = arith.mulf %48, %48 : vector<1x8x128xf32>
    %cst_19 = arith.constant dense<0.000000e+00> : vector<8x128xf32>
    %50 = vector.multi_reduction <add>, %49, %cst_19 [0] : vector<1x8x128xf32> to vector<8x128xf32>
    %cst_20 = arith.constant 1.000000e-24 : f32
    %51 = vector.broadcast %cst_20 : f32 to vector<8x128xf32>
    %52 = arith.maximumf %50, %51 : vector<8x128xf32>
    %53 = math.rsqrt %52 : vector<8x128xf32>
    %54 = arith.mulf %50, %53 : vector<8x128xf32>
    %c0_21 = arith.constant 0 : index
    %c0_22 = arith.constant 0 : index
    %55 = vector.load %arg5[%c0_21, %c0_22] : memref<1x128xf32, #tpu.memory_space<vmem>>, vector<1x128xf32>
    %c0_23 = arith.constant 0 : index
    %c0_24 = arith.constant 0 : index
    %56 = vector.load %arg6[%c0_23, %c0_24] : memref<1x128xf32, #tpu.memory_space<vmem>>, vector<1x128xf32>
    %cst_25 = arith.constant dense<0.000000e+00> : vector<8xf32>
    %57 = vector.multi_reduction <add>, %54, %cst_25 [1] : vector<8x128xf32> to vector<8xf32>
    %58 = vector.shape_cast %57 : vector<8xf32> to vector<8x1xf32>
    %cst_26 = arith.constant 1.280000e+02 : f32
    %59 = vector.broadcast %cst_26 : f32 to vector<8x1xf32>
    %60 = arith.divf %58, %59 : vector<8x1xf32>
    %61 = vector.broadcast %60 : vector<8x1xf32> to vector<8x128xf32>
    %62 = arith.subf %54, %61 : vector<8x128xf32>
    %63 = arith.mulf %62, %62 : vector<8x128xf32>
    %cst_27 = arith.constant dense<0.000000e+00> : vector<8xf32>
    %64 = vector.multi_reduction <add>, %63, %cst_27 [1] : vector<8x128xf32> to vector<8xf32>
    %65 = vector.shape_cast %64 : vector<8xf32> to vector<8x1xf32>
    %cst_28 = arith.constant 1.280000e+02 : f32
    %66 = vector.broadcast %cst_28 : f32 to vector<8x1xf32>
    %67 = arith.divf %65, %66 : vector<8x1xf32>
    %cst_29 = arith.constant 9.99999974E-6 : f32
    %68 = vector.broadcast %cst_29 : f32 to vector<8x1xf32>
    %69 = arith.addf %67, %68 : vector<8x1xf32>
    %70 = math.rsqrt %69 : vector<8x1xf32>
    %71 = vector.broadcast %70 : vector<8x1xf32> to vector<8x128xf32>
    %72 = arith.mulf %62, %71 : vector<8x128xf32>
    %73 = vector.broadcast %55 : vector<1x128xf32> to vector<8x128xf32>
    %74 = arith.mulf %72, %73 : vector<8x128xf32>
    %75 = vector.broadcast %56 : vector<1x128xf32> to vector<8x128xf32>
    %76 = arith.addf %74, %75 : vector<8x128xf32>
    %cst_30 = arith.constant 5.000000e-01 : f32
    %77 = vector.broadcast %cst_30 : f32 to vector<8x128xf32>
    %78 = arith.mulf %77, %76 : vector<8x128xf32>
    %cst_31 = arith.constant 4.471500e-02 : f32
    %79 = vector.broadcast %cst_31 : f32 to vector<8x128xf32>
    %80 = arith.mulf %79, %76 : vector<8x128xf32>
    %81 = arith.mulf %80, %76 : vector<8x128xf32>
    %82 = arith.mulf %81, %76 : vector<8x128xf32>
    %83 = arith.addf %76, %82 : vector<8x128xf32>
    %cst_32 = arith.constant 0.797884583 : f32
    %84 = vector.broadcast %cst_32 : f32 to vector<8x128xf32>
    %85 = arith.mulf %84, %83 : vector<8x128xf32>
    %86 = math.tanh %85 : vector<8x128xf32>
    %cst_33 = arith.constant 1.000000e+00 : f32
    %87 = vector.broadcast %cst_33 : f32 to vector<8x128xf32>
    %88 = arith.addf %87, %86 : vector<8x128xf32>
    %89 = arith.mulf %78, %88 : vector<8x128xf32>
    %90 = arith.mulf %89, %53 : vector<8x128xf32>
    %c0_34 = arith.constant 0 : index
    %c0_35 = arith.constant 0 : index
    %91 = vector.load %arg7[%c0_34, %c0_35] : memref<128x32xf32, #tpu.memory_space<vmem>>, vector<128x32xf32>
    %92 = vector.shape_cast %90 : vector<8x128xf32> to vector<1x8x128xf32>
    %93 = arith.mulf %48, %92 : vector<1x8x128xf32>
    %94 = vector.shape_cast %93 : vector<1x8x128xf32> to vector<8x128xf32>
    %cst_36 = arith.constant dense<0.000000e+00> : vector<8x32xf32>
    %95 = tpu.matmul %94, %91, %cst_36 {dimension_numbers = #tpu.dot_dimension_numbers<[1], [0], [0], [1], [0, 0, 1, 1], [], []>} : vector<8x128xf32>, vector<128x32xf32>, vector<8x32xf32> -> vector<8x32xf32>
    %c0_37 = arith.constant 0 : index
    %c0_38 = arith.constant 0 : index
    %c0_39 = arith.constant 0 : index
    %96 = vector.load %arg1[%c0_37, %c0_38, %c0_39] : memref<1x8x32xf32, #tpu.memory_space<vmem>>, vector<1x8x32xf32>
    %97 = vector.shape_cast %95 : vector<8x32xf32> to vector<1x8x32xf32>
    %98 = arith.addf %97, %96 : vector<1x8x32xf32>
    %c0_40 = arith.constant 0 : index
    %c0_41 = arith.constant 0 : index
    %c0_42 = arith.constant 0 : index
    %99 = vector.load %arg8[%c0_40, %c0_41, %c0_42] : memref<1x8x32xf32, #tpu.memory_space<vmem>>, vector<1x8x32xf32>
    tpu.vector_store %arg8[%c0_40, %c0_41, %c0_42], %98 {strides = array<i32>} : memref<1x8x32xf32, #tpu.memory_space<vmem>>, vector<1x8x32xf32>,
    return
  }
  func.func @transform_0(%arg0: i32) -> (i32, i32, i32) {
    %c0_i32 = arith.constant 0 : i32
    %c0_i32_0 = arith.constant 0 : i32
    %c0_i32_1 = arith.constant 0 : i32
    return %c0_i32, %arg0, %c0_i32_0 : i32, i32, i32
  }
  func.func @transform_1(%arg0: i32) -> (i32, i32) {
    %c0_i32 = arith.constant 0 : i32
    %c0_i32_0 = arith.constant 0 : i32
    %c0_i32_1 = arith.constant 0 : i32
    return %c0_i32, %c0_i32_0 : i32, i32
  }
  func.func @transform_2(%arg0: i32) -> (i32, i32) {
    %c0_i32 = arith.constant 0 : i32
    %c0_i32_0 = arith.constant 0 : i32
    %c0_i32_1 = arith.constant 0 : i32
    return %c0_i32, %c0_i32_0 : i32, i32
  }
  func.func @transform_3(%arg0: i32) -> (i32, i32) {
    %c0_i32 = arith.constant 0 : i32
    %c0_i32_0 = arith.constant 0 : i32
    %c0_i32_1 = arith.constant 0 : i32
    return %c0_i32, %c0_i32_0 : i32, i32
  }
  func.func @transform_4(%arg0: i32) -> (i32, i32) {
    %c0_i32 = arith.constant 0 : i32
    %c0_i32_0 = arith.constant 0 : i32
    %c0_i32_1 = arith.constant 0 : i32
    return %c0_i32, %c0_i32_0 : i32, i32
  }
  func.func @transform_5(%arg0: i32) -> (i32, i32) {
    %c0_i32 = arith.constant 0 : i32
    %c0_i32_0 = arith.constant 0 : i32
    %c0_i32_1 = arith.constant 0 : i32
    return %c0_i32, %c0_i32_0 : i32, i32
  }
  func.func @transform_6(%arg0: i32) -> (i32, i32) {
    %c0_i32 = arith.constant 0 : i32
    %c0_i32_0 = arith.constant 0 : i32
    %c0_i32_1 = arith.constant 0 : i32
    return %c0_i32, %c0_i32_0 : i32, i32
  }
  func.func @transform_7(%arg0: i32) -> (i32, i32, i32) {
    %c0_i32 = arith.constant 0 : i32
    %c0_i32_0 = arith.constant 0 : i32
    %c0_i32_1 = arith.constant 0 : i32
    return %c0_i32, %arg0, %c0_i32_0 : i32, i32, i32
  }
}

</mosaic_0001>

<llo_original>
// kernel: tpu_custom_call.1
$region0: #{tpu_custom_call.1}
  #allocation0 [shape = 'u32[]', space=smem, size = 0x4, offset = 0x4, fixed_abs, tag = 'smem constant byte address 0x4 - core index']
  #allocation1 [shape = 'u32[72,128]{1,0:T(1,128)}', space=vmem, size = 0x9000, scoped, tag = 'internal scratch']
  %s0 = inlined_call_operand.vmem [shape: f32[1,16,32], index: 0, kind: input, shape index: {}]
  %s1 = inlined_call_operand.vmem [shape: f32[1,32], index: 1, kind: input, shape index: {}]
  %s2 = inlined_call_operand.vmem [shape: f32[1,32], index: 2, kind: input, shape index: {}]
  %s3 = inlined_call_operand.vmem [shape: f32[32,128], index: 3, kind: input, shape index: {}]
  %s4 = inlined_call_operand.vmem [shape: f32[1,128], index: 4, kind: input, shape index: {}]
  %s5 = inlined_call_operand.vmem [shape: f32[1,128], index: 5, kind: input, shape index: {}]
  %s6 = inlined_call_operand.vmem [shape: f32[128,32], index: 6, kind: input, shape index: {}]
  %s7 = inlined_call_operand.hbm [shape: f32[1,16,32], index: 7, kind: output, shape index: {}]
  %s8 = sld [smem:[#allocation0]]
  $region61: #{tpu_custom_call.1} parent=0
    _
  %s10 = ssub.s32 1, %s8
  %s11 = scalar_select 0, %s10, %s8
  $region1: #{tpu_custom_call.1} parent=0
    #allocation2 [shape = 'u8[8192]{0}', space=vmem, size = 0x2000, scoped, tag = 'output window, operand 0']
    #allocation3 [shape = 's32[2]{0}', space=sflag, size = 0x8, scoped, tag = 'scoped memory for tpu_custom_call.1']
    %12 = vsyncpa [#allocation3], 0
    %s13 = scalar_lea.sflag [#allocation3], 1
    %14 = vsyncpa %s13, 0
    loop: start=0, step=1, limit=4
    $region2: #{tpu_custom_call.1} parent=1 // loop_pre_header
      _
    $region3: #{tpu_custom_call.1} parent=1 // loop_header
      %s16 = sphi 0, %s20
      %p17 = scmp.ge.s32.totalorder %s16, 4
      %s26 = sphi 0, %s28
      %s29 = sphi 0, %s26
      %s30 = sphi 0, %s29
      %s46 = sphi 0, %s30
      %s50 = sphi 0, %s50
      %s52 = sphi 0, %s50
      %s53 = sphi 0, %s52
      %s67 = sphi 0, %s53
      %s71 = sphi 0, %s71
      %s73 = sphi 0, %s71
      %s74 = sphi 0, %s73
      %s88 = sphi 0, %s74
      %s92 = sphi 0, %s92
      %s94 = sphi 0, %s92
      %s95 = sphi 0, %s94
      %s109 = sphi 0, %s95
      %s113 = sphi 0, %s113
      %s115 = sphi 0, %s113
      %s116 = sphi 0, %s115
      %s130 = sphi 0, %s116
      %s134 = sphi 0, %s134
      %s136 = sphi 0, %s134
      %s137 = sphi 0, %s136
      %s151 = sphi 0, %s137
      %s155 = sphi 0, %s155
      %s157 = sphi 0, %s155
      %s158 = sphi 0, %s157
      %s172 = sphi 0, %s158
      %s178 = sphi 0, %s180
      %s181 = sphi 0, %s178
      %s182 = sphi 0, %s181
      %s198 = sphi 0, %s182
    $region4: #{tpu_custom_call.1} parent=1 // loop_header_branch
      %19 = sbr.rel (%p17) target = $region8
    $region5: #{tpu_custom_call.1} parent=1 // loop_body
      %s21 = ssub.s32 %s16, 1
      %s22 = ssub.s32 %s16, 2
      %s23 = sadd.s32 %s16, 1
      %s24 = ssub.s32 %s16, %s23
      %p25 = scmp.eq.s32.totalorder %s24, 0
      %s27 = sadd.s32 %s26, 1
      %s28 = scalar_select %p25, %s26, %s27
      %p31 = pneg %p25
      %p32 = scmp.eq.s32.totalorder %s16, 1
      %p33 = por %p31, %p32
      %p34 = scmp.ne.s32.totalorder %s26, %s29
      %p35 = scmp.eq.s32.totalorder %s16, 0
      %p36 = por %p34, %p35
      %p37 = scmp.ne.s32.totalorder %s26, %s29
      %p38 = scmp.eq.s32.totalorder %s21, 1
      %p39 = por %p37, %p38
      %p40 = scmp.ne.s32.totalorder %s29, %s30
      %p41 = scmp.eq.s32.totalorder %s21, 0
      %p42 = por %p40, %p41
      %p43 = scmp.ne.s32.totalorder %s29, %s30
      %p44 = scmp.eq.s32.totalorder %s22, 1
      %p45 = por %p43, %p44
      %p47 = scmp.ne.s32.totalorder %s30, %s46
      %p48 = scmp.eq.s32.totalorder %s22, 0
      %p49 = por %p47, %p48
      %s51 = sadd.s32 %s50, 1
      %p54 = scmp.eq.s32.totalorder %s16, 1
      %p55 = scmp.ne.s32.totalorder %s50, %s52
      %p56 = scmp.eq.s32.totalorder %s16, 0
      %p57 = por %p55, %p56
      %p58 = scmp.ne.s32.totalorder %s50, %s52
      %p59 = scmp.eq.s32.totalorder %s21, 1
      %p60 = por %p58, %p59
      %p61 = scmp.ne.s32.totalorder %s52, %s53
      %p62 = scmp.eq.s32.totalorder %s21, 0
      %p63 = por %p61, %p62
      %p64 = scmp.ne.s32.totalorder %s52, %s53
      %p65 = scmp.eq.s32.totalorder %s22, 1
      %p66 = por %p64, %p65
      %p68 = scmp.ne.s32.totalorder %s53, %s67
      %p69 = scmp.eq.s32.totalorder %s22, 0
      %p70 = por %p68, %p69
      %s72 = sadd.s32 %s71, 1
      %p75 = scmp.eq.s32.totalorder %s16, 1
      %p76 = scmp.ne.s32.totalorder %s71, %s73
      %p77 = scmp.eq.s32.totalorder %s16, 0
      %p78 = por %p76, %p77
      %p79 = scmp.ne.s32.totalorder %s71, %s73
      %p80 = scmp.eq.s32.totalorder %s21, 1
      %p81 = por %p79, %p80
      %p82 = scmp.ne.s32.totalorder %s73, %s74
      %p83 = scmp.eq.s32.totalorder %s21, 0
      %p84 = por %p82, %p83
      %p85 = scmp.ne.s32.totalorder %s73, %s74
      %p86 = scmp.eq.s32.totalorder %s22, 1
      %p87 = por %p85, %p86
      %p89 = scmp.ne.s32.totalorder %s74, %s88
      %p90 = scmp.eq.s32.totalorder %s22, 0
      %p91 = por %p89, %p90
      %s93 = sadd.s32 %s92, 1
      %p96 = scmp.eq.s32.totalorder %s16, 1
      %p97 = scmp.ne.s32.totalorder %s92, %s94
      %p98 = scmp.eq.s32.totalorder %s16, 0
      %p99 = por %p97, %p98
      %p100 = scmp.ne.s32.totalorder %s92, %s94
      %p101 = scmp.eq.s32.totalorder %s21, 1
      %p102 = por %p100, %p101
      %p103 = scmp.ne.s32.totalorder %s94, %s95
      %p104 = scmp.eq.s32.totalorder %s21, 0
      %p105 = por %p103, %p104
      %p106 = scmp.ne.s32.totalorder %s94, %s95
      %p107 = scmp.eq.s32.totalorder %s22, 1
      %p108 = por %p106, %p107
      %p110 = scmp.ne.s32.totalorder %s95, %s109
      %p111 = scmp.eq.s32.totalorder %s22, 0
      %p112 = por %p110, %p111
      %s114 = sadd.s32 %s113, 1
      %p117 = scmp.eq.s32.totalorder %s16, 1
      %p118 = scmp.ne.s32.totalorder %s113, %s115
      %p119 = scmp.eq.s32.totalorder %s16, 0
      %p120 = por %p118, %p119
      %p121 = scmp.ne.s32.totalorder %s113, %s115
      %p122 = scmp.eq.s32.totalorder %s21, 1
      %p123 = por %p121, %p122
      %p124 = scmp.ne.s32.totalorder %s115, %s116
      %p125 = scmp.eq.s32.totalorder %s21, 0
      %p126 = por %p124, %p125
      %p127 = scmp.ne.s32.totalorder %s115, %s116
      %p128 = scmp.eq.s32.totalorder %s22, 1
      %p129 = por %p127, %p128
      %p131 = scmp.ne.s32.totalorder %s116, %s130
      %p132 = scmp.eq.s32.totalorder %s22, 0
      %p133 = por %p131, %p132
      %s135 = sadd.s32 %s134, 1
      %p138 = scmp.eq.s32.totalorder %s16, 1
      %p139 = scmp.ne.s32.totalorder %s134, %s136
      %p140 = scmp.eq.s32.totalorder %s16, 0
      %p141 = por %p139, %p140
      %p142 = scmp.ne.s32.totalorder %s134, %s136
      %p143 = scmp.eq.s32.totalorder %s21, 1
      %p144 = por %p142, %p143
      %p145 = scmp.ne.s32.totalorder %s136, %s137
      %p146 = scmp.eq.s32.totalorder %s21, 0
      %p147 = por %p145, %p146
      %p148 = scmp.ne.s32.totalorder %s136, %s137
      %p149 = scmp.eq.s32.totalorder %s22, 1
      %p150 = por %p148, %p149
      %p152 = scmp.ne.s32.totalorder %s137, %s151
      %p153 = scmp.eq.s32.totalorder %s22, 0
      %p154 = por %p152, %p153
      %s156 = sadd.s32 %s155, 1
      %p159 = scmp.eq.s32.totalorder %s16, 1
      %p160 = scmp.ne.s32.totalorder %s155, %s157
      %p161 = scmp.eq.s32.totalorder %s16, 0
      %p162 = por %p160, %p161
      %p163 = scmp.ne.s32.totalorder %s155, %s157
      %p164 = scmp.eq.s32.totalorder %s21, 1
      %p165 = por %p163, %p164
      %p166 = scmp.ne.s32.totalorder %s157, %s158
      %p167 = scmp.eq.s32.totalorder %s21, 0
      %p168 = por %p166, %p167
      %p169 = scmp.ne.s32.totalorder %s157, %s158
      %p170 = scmp.eq.s32.totalorder %s22, 1
      %p171 = por %p169, %p170
      %p173 = scmp.ne.s32.totalorder %s158, %s172
      %p174 = scmp.eq.s32.totalorder %s22, 0
      %p175 = por %p173, %p174
      %s176 = ssub.s32 %s16, %s23
      %p177 = scmp.eq.s32.totalorder %s176, 0
      %s179 = sadd.s32 %s178, 1
      %s180 = scalar_select %p177, %s178, %s179
      %p183 = pneg %p177
      %p184 = scmp.eq.s32.totalorder %s16, 1
      %p185 = por %p183, %p184
      %p186 = scmp.ne.s32.totalorder %s178, %s181
      %p187 = scmp.eq.s32.totalorder %s16, 0
      %p188 = por %p186, %p187
      %p189 = scmp.ne.s32.totalorder %s178, %s181
      %p190 = scmp.eq.s32.totalorder %s21, 1
      %p191 = por %p189, %p190
      %p192 = scmp.ne.s32.totalorder %s181, %s182
      %p193 = scmp.eq.s32.totalorder %s21, 0
      %p194 = por %p192, %p193
      %p195 = scmp.ne.s32.totalorder %s181, %s182
      %p196 = scmp.eq.s32.totalorder %s22, 1
      %p197 = por %p195, %p196
      %p199 = scmp.ne.s32.totalorder %s182, %s198
      %p200 = scmp.eq.s32.totalorder %s22, 0
      %p201 = por %p199, %p200
      %p202 = scmp.le.s32.totalorder 1, %s16
      %p203 = scmp.lt.s32.totalorder %s16, 3
      %p204 = pnand %p202, %p203
      %p205 = pneg %p204
      // Predicated region
      $region9: #{tpu_custom_call.1} parent=5 // pred_check
        _
      $region10: #{tpu_custom_call.1} parent=5 // pred_check_branch
        %207 = sbr.rel (%p204) target = $region12
      $region11: #{tpu_custom_call.1} parent=5 // pred_region
        %s208 = ssub.s32 %s16, 1
        // Predicated region
        $region13: #{tpu_custom_call.1} parent=11 // pred_check
          %p209 = pneg %p63
        $region14: #{tpu_custom_call.1} parent=11 // pred_check_branch
          %211 = sbr.rel (%p209) target = $region16
        $region15: #{tpu_custom_call.1} parent=11 // pred_region
          _
        $region16: #{tpu_custom_call.1} parent=11 // pred_fallthru
          _
        // Predicated region
        $region17: #{tpu_custom_call.1} parent=11 // pred_check
          %p212 = pneg %p84
        $region18: #{tpu_custom_call.1} parent=11 // pred_check_branch
          %214 = sbr.rel (%p212) target = $region20
        $region19: #{tpu_custom_call.1} parent=11 // pred_region
          _
        $region20: #{tpu_custom_call.1} parent=11 // pred_fallthru
          _
        // Predicated region
        $region21: #{tpu_custom_call.1} parent=11 // pred_check
          %p215 = pneg %p105
        $region22: #{tpu_custom_call.1} parent=11 // pred_check_branch
          %217 = sbr.rel (%p215) target = $region24
        $region23: #{tpu_custom_call.1} parent=11 // pred_region
          _
        $region24: #{tpu_custom_call.1} parent=11 // pred_fallthru
          _
        // Predicated region
        $region25: #{tpu_custom_call.1} parent=11 // pred_check
          %p218 = pneg %p126
        $region26: #{tpu_custom_call.1} parent=11 // pred_check_branch
          %220 = sbr.rel (%p218) target = $region28
        $region27: #{tpu_custom_call.1} parent=11 // pred_region
          _
        $region28: #{tpu_custom_call.1} parent=11 // pred_fallthru
          _
        // Predicated region
        $region29: #{tpu_custom_call.1} parent=11 // pred_check
          %p221 = pneg %p147
        $region30: #{tpu_custom_call.1} parent=11 // pred_check_branch
          %223 = sbr.rel (%p221) target = $region32
        $region31: #{tpu_custom_call.1} parent=11 // pred_region
          _
        $region32: #{tpu_custom_call.1} parent=11 // pred_fallthru
          _
        // Predicated region
        $region33: #{tpu_custom_call.1} parent=11 // pred_check
          %p224 = pneg %p168
        $region34: #{tpu_custom_call.1} parent=11 // pred_check_branch
          %226 = sbr.rel (%p224) target = $region36
        $region35: #{tpu_custom_call.1} parent=11 // pred_region
          _
        $region36: #{tpu_custom_call.1} parent=11 // pred_fallthru
          _
      $region12: #{tpu_custom_call.1} parent=5 // pred_fallthru
        _
      %p227 = scmp.lt.s32.totalorder %s16, 2
      // Predicated region
      $region37: #{tpu_custom_call.1} parent=5 // pred_check
        %p228 = pneg %p227
      $region38: #{tpu_custom_call.1} parent=5 // pred_check_branch
        %230 = sbr.rel (%p228) target = $region40
      $region39: #{tpu_custom_call.1} parent=5 // pred_region
        // Predicated region
        $region41: #{tpu_custom_call.1} parent=39 // pred_check
          %p231 = pneg %p36
        $region42: #{tpu_custom_call.1} parent=39 // pred_check_branch
          %233 = sbr.rel (%p231) target = $region44
        $region43: #{tpu_custom_call.1} parent=39 // pred_region
          %p234 = scmp.lt.s32.totalorder %s16, 1
          %s235 = scalar_select %p234, %s16, 1
          %s236 = smul.addr %s235, 8
          %s237 = scalar_lea.vmem %s0, %s236
        $region44: #{tpu_custom_call.1} parent=39 // pred_fallthru
          _
      $region40: #{tpu_custom_call.1} parent=5 // pred_fallthru
        _
      %p238 = scmp.le.s32.totalorder 1, %s16
      %p239 = scmp.lt.s32.totalorder %s16, 3
      %p240 = pnand %p238, %p239
      %p241 = pneg %p240
      // Predicated region
      $region45: #{tpu_custom_call.1} parent=5 // pred_check
        _
      $region46: #{tpu_custom_call.1} parent=5 // pred_check_branch
        %243 = sbr.rel (%p240) target = $region48
      $region47: #{tpu_custom_call.1} parent=5 // pred_region
        %s244 = ssub.s32 %s16, 1
        %p245 = scmp.lt.s32.totalorder %s21, 1
        %s246 = scalar_select %p245, %s21, 1
        %s247 = smul.addr %s246, 8
        %s248 = scalar_lea.vmem %s0, %s247
        %p249 = pneg %p42
        %p250 = pneg %p39
        %p251 = pneg %p63
        %p252 = pneg %p60
        %p253 = pneg %p84
        %p254 = pneg %p81
        %p255 = pneg %p105
        %p256 = pneg %p102
        %p257 = pneg %p126
        %p258 = pneg %p123
        %p259 = pneg %p147
        %p260 = pneg %p144
        %p261 = pneg %p168
        %p262 = pneg %p165
        %p263 = pneg %p194
        %p264 = pneg %p191
        %s265 = sand.u32 %s181, 1
        %s266 = scalar_lea.sflag [#allocation3], %s265
        %s267 = sand.u32 %s181, 1
        %s268 = smul.addr %s267, 8
        %s269 = scalar_lea.vmem [#allocation2], %s268
        %p270 = scmp.lt.s32.totalorder %s21, 1
        %s271 = scalar_select %p270, %s21, 1
        %s272 = smul.addr %s271, 8
        %s273 = scalar_lea.vmem %s0, %s272
        %v274 = vld [vmem:[%s273] sm:$0xff]
        %v275 = vmul.f32 %v274, %v274
        %v276 = vadd.f32 %v275, 0.0
        %v277 = vmax.f32 %v276, 1e-24
        %v278 = vrsqrt.pop %v277
        %v279 = vmul.f32 %v278, %v277
        %v280 = vmul.f32 %v279, %v278
        %v281 = vmul.f32 0.5, %v280
        %v282 = vsub.f32 1.5, %v281
        %v283 = vmul.f32 %v278, %v282
        %vm284 = vweird.f32 %v277
        %vm285 = vweird.f32 %v278
        %vm286 = vmor %vm284, %vm285
        %v287 = vsel %vm286, %v278, %v283
        %v288 = vmul.f32 %v276, %v287
        %v289 = vld [vmem:[%s1] sm:$0x1]
        %v290 = vld [vmem:[%s2] sm:$0x1]
        %vm291 = vcmask 261120
        %v292 = vsel %vm291, %v288, 0.0
        %293 = vadd.xlane.f32.xlu0 %v292
        %v294 = vpop.xlane.xlu0 %293
        %v295 = vrcp.pop 32.0
        %v296 = vmul.f32 32.0, %v295
        %v297 = vsub.f32 1.0, %v296
        %v298 = vmul.f32 %v295, %v297
        %v299 = vadd.f32 %v295, %v298
        %vm300 = vweird.f32 %v295
        %v301 = vsel %vm300, %v295, %v299
        %v302 = vmul.f32 %v294, %v301
        %v303 = vsub.f32 %v288, %v302
        %v304 = vmul.f32 %v303, %v303
        %v305 = vsel %vm291, %v304, 0.0
        %306 = vadd.xlane.f32.xlu0 %v305
        %v307 = vpop.xlane.xlu0 %306
        %v308 = vmul.f32 %v307, %v301
        %v309 = vadd.f32 %v308, 1e-05
        %v310 = vrsqrt.pop %v309
        %v311 = vmul.f32 %v310, %v309
        %v312 = vmul.f32 %v311, %v310
        %v313 = vmul.f32 0.5, %v312
        %v314 = vsub.f32 1.5, %v313
        %v315 = vmul.f32 %v310, %v314
        %vm316 = vweird.f32 %v309
        %vm317 = vweird.f32 %v310
        %vm318 = vmor %vm316, %vm317
        %v319 = vsel %vm318, %v310, %v315
        %v320 = vmul.f32 %v303, %v319
        %v322 = vperm.slane %v289, 0
        %v324 = vmul.f32 %v320, %v322
        %v326 = vperm.slane %v290, 0
        %v328 = vadd.f32 %v324, %v326
        %v329 = vmul.f32 %v328, 0.5
        %v330 = vmul.f32 %v328, 0.044715
        %v331 = vmul.f32 %v330, %v328
        %v332 = vmul.f32 %v331, %v328
        %v333 = vadd.f32 %v328, %v332
        %v334 = vmul.f32 %v333, 0.7978846
        %v335 = vtanh.pop %v334
        %v336 = vadd.f32 %v335, 1.0
        %v337 = vmul.f32 %v329, %v336
        %v338 = vmul.f32 %v337, %v287
        %v339 = vld [vmem:[%s3] sm:$0xff]
        %v340 = vld [vmem:[%s3 + $0x8] sm:$0xff]
        %v341 = vld [vmem:[%s3 + $0x10] sm:$0xff]
        %v342 = vld [vmem:[%s3 + $0x18] sm:$0xff]
        %v343 = vmul.f32 %v274, %v338
        %v345 = vsel %vm291, %v343, 0
        %347 = vmatpush.msra.mxu0 0.0
        %348 = vmatpush.msra.mxu0 0.0
        %349 = vmatpush.msra.mxu0 0.0
        %350 = vmatpush.msra.mxu0 0.0
        %351 = vmatpush.msra.mxu0 0.0
        %352 = vmatpush.msra.mxu0 0.0
        %353 = vmatpush.msra.mxu0 0.0
        %354 = vmatpush.msra.mxu0 0.0
        %355 = vmatpush.msra.mxu0 0.0
        %356 = vmatpush.msra.mxu0 0.0
        %357 = vmatpush.msra.mxu0 0.0
        %358 = vmatpush.msra.mxu0 0.0
        %359 = vmatpush.msra.mxu0 %v342
        %360 = vmatpush.msra.mxu0 %v341
        %361 = vmatpush.msra.mxu0 %v340
        %362 = vmatpush.msra.mxu0 %v339
        %363 = vmatmul.f32.gmra.mxu0 %v345
        %v364 = vpop.f32.mrf.mxu0
        %v365 = vadd.f32 0.0, %v364
        %366 = vdwg.mxu0
        %v367 = vmul.f32 %v365, %v365
        %v368 = vadd.f32 %v367, 0.0
        %v369 = vmax.f32 %v368, 1e-24
        %v370 = vrsqrt.pop %v369
        %v371 = vmul.f32 %v370, %v369
        %v372 = vmul.f32 %v371, %v370
        %v373 = vmul.f32 0.5, %v372
        %v374 = vsub.f32 1.5, %v373
        %v375 = vmul.f32 %v370, %v374
        %vm376 = vweird.f32 %v369
        %vm377 = vweird.f32 %v370
        %vm378 = vmor %vm376, %vm377
        %v379 = vsel %vm378, %v370, %v375
        %v380 = vmul.f32 %v368, %v379
        %v381 = vld [vmem:[%s4] sm:$0x1]
        %v382 = vld [vmem:[%s5] sm:$0x1]
        %383 = vadd.xlane.f32.xlu0 %v380
        %v384 = vpop.xlane.xlu0 %383
        %v385 = vrcp.pop 128.0
        %v386 = vmul.f32 128.0, %v385
        %v387 = vsub.f32 1.0, %v386
        %v388 = vmul.f32 %v385, %v387
        %v389 = vadd.f32 %v385, %v388
        %vm390 = vweird.f32 %v385
        %v391 = vsel %vm390, %v385, %v389
        %v392 = vmul.f32 %v384, %v391
        %v393 = vsub.f32 %v380, %v392
        %v394 = vmul.f32 %v393, %v393
        %395 = vadd.xlane.f32.xlu0 %v394
        %v396 = vpop.xlane.xlu0 %395
        %v397 = vmul.f32 %v396, %v391
        %v398 = vadd.f32 %v397, 1e-05
        %v399 = vrsqrt.pop %v398
        %v400 = vmul.f32 %v399, %v398
        %v401 = vmul.f32 %v400, %v399
        %v402 = vmul.f32 0.5, %v401
        %v403 = vsub.f32 1.5, %v402
        %v404 = vmul.f32 %v399, %v403
        %vm405 = vweird.f32 %v398
        %vm406 = vweird.f32 %v399
        %vm407 = vmor %vm405, %vm406
        %v408 = vsel %vm407, %v399, %v404
        %v409 = vmul.f32 %v393, %v408
        %v411 = vperm.slane %v381, 0
        %v413 = vmul.f32 %v409, %v411
        %v415 = vperm.slane %v382, 0
        %v417 = vadd.f32 %v413, %v415
        %v418 = vmul.f32 %v417, 0.5
        %v419 = vmul.f32 %v417, 0.044715
        %v420 = vmul.f32 %v419, %v417
        %v421 = vmul.f32 %v420, %v417
        %v422 = vadd.f32 %v417, %v421
        %v423 = vmul.f32 %v422, 0.7978846
        %v424 = vtanh.pop %v423
        %v425 = vadd.f32 %v424, 1.0
        %v426 = vmul.f32 %v418, %v425
        %v427 = vmul.f32 %v426, %v379
        %v428 = vld [vmem:[%s6] sm:$0xff]
        %v429 = vld [vmem:[%s6 + $0x8] sm:$0xff]
        %v430 = vld [vmem:[%s6 + $0x10] sm:$0xff]
        %v431 = vld [vmem:[%s6 + $0x18] sm:$0xff]
        %v432 = vld [vmem:[%s6 + $0x20] sm:$0xff]
        %v433 = vld [vmem:[%s6 + $0x28] sm:$0xff]
        %v434 = vld [vmem:[%s6 + $0x30] sm:$0xff]
        %v435 = vld [vmem:[%s6 + $0x38] sm:$0xff]
        %v436 = vld [vmem:[%s6 + $0x40] sm:$0xff]
        %v437 = vld [vmem:[%s6 + $0x48] sm:$0xff]
        %v438 = vld [vmem:[%s6 + $0x50] sm:$0xff]
        %v439 = vld [vmem:[%s6 + $0x58] sm:$0xff]
        %v440 = vld [vmem:[%s6 + $0x60] sm:$0xff]
        %v441 = vld [vmem:[%s6 + $0x68] sm:$0xff]
        %v442 = vld [vmem:[%s6 + $0x70] sm:$0xff]
        %v443 = vld [vmem:[%s6 + $0x78] sm:$0xff]
        %v444 = vmul.f32 %v365, %v427
        %445 = vmatpush.msra.mxu0 %v443
        %446 = vmatpush.msra.mxu0 %v442
        %447 = vmatpush.msra.mxu0 %v441
        %448 = vmatpush.msra.mxu0 %v440
        %449 = vmatpush.msra.mxu0 %v439
        %450 = vmatpush.msra.mxu0 %v438
        %451 = vmatpush.msra.mxu0 %v437
        %452 = vmatpush.msra.mxu0 %v436
        %453 = vmatpush.msra.mxu0 %v435
        %454 = vmatpush.msra.mxu0 %v434
        %455 = vmatpush.msra.mxu0 %v433
        %456 = vmatpush.msra.mxu0 %v432
        %457 = vmatpush.msra.mxu0 %v431
        %458 = vmatpush.msra.mxu0 %v430
        %459 = vmatpush.msra.mxu0 %v429
        %460 = vmatpush.msra.mxu0 %v428
        %461 = vmatmul.f32.gmra.mxu0 %v444
        %v462 = vpop.f32.mrf.mxu0
        %v463 = vadd.f32 0.0, %v462
        %464 = vdwg.mxu0
        %v465 = vadd.f32 %v463, %v274
        %466 = vst.msk [vmem:[%s269] sm:$0xff] %vm291, %v465
        %s467 = sand.u32 %s181, 1
        %s468 = scalar_lea.sflag [#allocation3], %s467
        %s469 = sand.u32 %s181, 1
        %s470 = smul.addr %s469, 8
        %s471 = scalar_lea.vmem [#allocation2], %s470
        // Predicated region
        $region49: #{tpu_custom_call.1} parent=47 // pred_check
          %p472 = pneg %p191
        $region50: #{tpu_custom_call.1} parent=47 // pred_check_branch
          %474 = sbr.rel (%p472) target = $region52
        $region51: #{tpu_custom_call.1} parent=47 // pred_region
          %476 = vsyncadd %s468, 0
          %s477 = smul.addr %s21, 8
          %s478 = scalar_lea.hbm %s7, %s477
          %s480 = sshll.u32 %s471, 4
          %s481 = int_to_ptr.vmem [resolvable:$true] %s480
          %s482 = sshll.u32 %s478, 4
          %s483 = int_to_ptr.hbm [resolvable:$true] %s482
          %485 = dma.vmem_to_hbm [thread:$0]  %s481, 128, %s483, %s468
        $region52: #{tpu_custom_call.1} parent=47 // pred_fallthru
          _
      $region48: #{tpu_custom_call.1} parent=5 // pred_fallthru
        _
      %p486 = scmp.le.s32.totalorder 2, %s16
      // Predicated region
      $region53: #{tpu_custom_call.1} parent=5 // pred_check
        %p487 = pneg %p486
      $region54: #{tpu_custom_call.1} parent=5 // pred_check_branch
        %489 = sbr.rel (%p487) target = $region56
      $region55: #{tpu_custom_call.1} parent=5 // pred_region
        %s490 = ssub.s32 %s16, 2
        // Predicated region
        $region57: #{tpu_custom_call.1} parent=55 // pred_check
          %p491 = pneg %p197
        $region58: #{tpu_custom_call.1} parent=55 // pred_check_branch
          %493 = sbr.rel (%p491) target = $region60
        $region59: #{tpu_custom_call.1} parent=55 // pred_region
          %s494 = sand.u32 %s182, 1
          %s495 = scalar_lea.sflag [#allocation3], %s494
          %s496 = sand.u32 %s182, 1
          %s497 = smul.addr %s496, 8
          %s498 = scalar_lea.vmem [#allocation2], %s497
          %500 = dma.done %s495, 128
        $region60: #{tpu_custom_call.1} parent=55 // pred_fallthru
          _
      $region56: #{tpu_custom_call.1} parent=5 // pred_fallthru
        _
    $region6: #{tpu_custom_call.1} parent=1 // loop_footer
      %s20 = sadd.s32 1, %s16
    $region7: #{tpu_custom_call.1} parent=1 // loop_footer_branch
      %15 = sbr.rel target = $region3
    $region8: #{tpu_custom_call.1} parent=1 // loop_exit
      _
    %501 = vsyncpa [#allocation3], 1
    %s502 = scalar_lea.sflag [#allocation3], 1
    %503 = vsyncpa %s502, 1

</llo_original>
